<compile_context>
chip_gen: v5e
topology: v5e:2x2
jax: 0.10.0
libtpu: 0.0.40
codegen_flags: <defaults>
</compile_context>

<pallas_src>
import functools

import jax
import jax.numpy as jnp
from jax import lax
from jax.experimental import pallas as pl
from jax.experimental.pallas import tpu as pltpu


def _ceil_to(x, m):
    return ((x + m - 1) // m) * m


def _make_kernel(block_n, n_chunks):
    unroll = n_chunks <= 8

    def kernel(pred_col_ref, pred_row_ref, lab_col_ref, lab_row_ref, out_ref):
        p_col = pred_col_ref[...]   # (block_m, 1) f32
        l_col = lab_col_ref[...]    # (block_m, 1)

        def chunk_partial(p_row, l_row):
            # (block_m, 1) - (1, block_n) -> (block_m, block_n) VPU broadcast.
            diff = p_col - p_row
            d2 = diff * diff
            contrib = jnp.where(l_col == l_row, d2, 0.0)
            # Sublane collapse per chunk -> (1, block_n) f32.
            return jnp.sum(contrib, axis=0, keepdims=True)

        if n_chunks == 1:
            partial = chunk_partial(pred_row_ref[...], lab_row_ref[...])
        else:
            def body(c, acc):
                start = pl.multiple_of(c * block_n, block_n)
                p_row = pred_row_ref[:, pl.ds(start, block_n)]
                l_row = lab_row_ref[:, pl.ds(start, block_n)]
                return acc + chunk_partial(p_row, l_row)

            partial = lax.fori_loop(
                0, n_chunks, body,
                jnp.zeros((1, block_n), jnp.float32),
                unroll=unroll)

        # Lane reduce once per row tile; lane-dense (8, 128) output block.
        s_eq = jnp.sum(partial)
        out_ref[...] = jnp.full(out_ref.shape, s_eq, jnp.float32)

    return kernel


@functools.partial(jax.jit, static_argnames=("block_m", "block_n"))
def _contrastive_loss_impl(y_pred, y_true, block_m=None, block_n=None):
    n = y_pred.shape[0]

    pred = jnp.reshape(y_pred, (n, -1))[:, 0].astype(jnp.float32)
    labels = jnp.reshape(y_true, (n, -1))[:, 0]
    if labels.dtype == jnp.bool_:
        labels = labels.astype(jnp.int32)

    # Row-tile size: ceil(n/2) rounded to a sublane multiple, capped at 256,
    # so gm >= 2 for any non-trivial batch (keeps both v7x TensorCores busy)
    # while staying well inside VMEM on 64 MiB parts.
    if block_m is None:
        block_m = min(256, _ceil_to(max(1, (n + 1) // 2), 8))
    # Column chunk (lanes) walked by the in-kernel loop.
    if block_n is None:
        block_n = min(1024, _ceil_to(n, 128))

    assert block_m % 8 == 0, "block_m must be a multiple of 8 (sublanes)"
    assert block_n % 128 == 0, "block_n must be a multiple of 128 (lanes)"

    m_pad = _ceil_to(n, block_m)
    n_cols_pad = _ceil_to(n, block_n)
    gm = m_pad // block_m
    n_chunks = n_cols_pad // block_n

    # Sentinel label for padded slots: guaranteed absent from real labels, so
    # padded-vs-real pairs never match; padded-vs-padded pairs match but their
    # predictions are both 0, so d2 == 0. No validity masks needed.
    if jnp.issubdtype(labels.dtype, jnp.floating):
        sentinel = jnp.array(jnp.inf, labels.dtype)
    else:
        sentinel = (jnp.max(labels) + 1).astype(labels.dtype)

    pred_col = jnp.zeros((m_pad, 1), jnp.float32).at[:n, 0].set(pred)
    pred_row = jnp.zeros((1, n_cols_pad), jnp.float32).at[0, :n].set(pred)
    lab_col = jnp.full((m_pad, 1), sentinel, labels.dtype).at[:n, 0].set(labels)
    lab_row = jnp.full((1, n_cols_pad), sentinel, labels.dtype).at[0, :n].set(labels)

    partials = pl.pallas_call(
        _make_kernel(block_n, n_chunks),
        out_shape=jax.ShapeDtypeStruct((gm, 8, 128), jnp.float32),
        grid=(gm,),
        in_specs=[
            pl.BlockSpec((block_m, 1), lambda i: (i, 0)),
            pl.BlockSpec((1, n_cols_pad), lambda i: (0, 0)),
            pl.BlockSpec((block_m, 1), lambda i: (i, 0)),
            pl.BlockSpec((1, n_cols_pad), lambda i: (0, 0)),
        ],
        out_specs=pl.BlockSpec((1, 8, 128), lambda i: (i, 0, 0)),
        compiler_params=pltpu.CompilerParams(
            dimension_semantics=("parallel",),
            vmem_limit_bytes=32 * 1024 * 1024),
    )(pred_col, pred_row, lab_col, lab_row)

    s_eq = jnp.sum(partials[:, 0, 0])

    # Closed-form all-pairs term (O(N) work, fused into the same jit).
    sum_p = jnp.sum(pred)
    sum_p2 = jnp.sum(pred * pred)
    s_all = 2.0 * (jnp.float32(n) * sum_p2 - sum_p * sum_p)

    return 2.0 * s_eq - s_all


def contrastive_loss(y_pred, y_true, margin=1.0, block_m=None, block_n=None):
    """Pallas equivalent of ContrastiveLoss.forward.

    y_pred: (N, 1) float predictions, y_true: (N, 1) labels (any numeric dtype).
    Returns a scalar float32 loss. `margin` is unused (matches the reference).
    """
    del margin  # never read in the reference forward
    assert y_pred.shape == y_true.shape
    return _contrastive_loss_impl(y_pred, y_true, block_m=block_m, block_n=block_n)


def _reference_loss(y_pred, y_true):
    """Pure-JAX vectorized reference (identical math to the PyTorch loops;
    the i == j terms are zero so they need no special handling)."""
    n = y_pred.shape[0]
    p = jnp.reshape(y_pred, (n, -1))[:, 0].astype(jnp.float32)
    t = jnp.reshape(y_true, (n, -1))[:, 0]
    d2 = (p[:, None] - p[None, :]) ** 2
    return jnp.sum(jnp.where(t[:, None] == t[None, :], d2, -d2))


if __name__ == "__main__":
    key = jax.random.PRNGKey(0)
    k1, k2, k3, k4 = jax.random.split(key, 4)

    # Case 1: tiny batch, single row tile, single column chunk (padded to 128
    # lanes -> sentinel-label path with float labels).
    N = 8
    y_pred = jax.random.normal(k1, (N, 1), dtype=jnp.float32)
    y_true = jax.random.randint(k2, (N, 1), 0, 2).astype(jnp.float32)
    loss = jax.block_until_ready(contrastive_loss(y_pred, y_true))
    ref = jax.block_until_ready(_reference_loss(y_pred, y_true))
    assert jnp.allclose(loss, ref, rtol=1e-4, atol=1e-2), (loss, ref)

    # Case 2: multiple row tiles + in-kernel column loop, no padding needed
    # (N divisible by both block sizes), integer labels.
    N2 = 256
    y_pred2 = jax.random.normal(k3, (N2, 1), dtype=jnp.float32)
    y_true2 = jax.random.randint(k4, (N2, 1), 0, 4).astype(jnp.int32)
    loss2 = jax.block_until_ready(
        contrastive_loss(y_pred2, y_true2, block_m=128, block_n=128))
    ref2 = jax.block_until_ready(_reference_loss(y_pred2, y_true2))
    assert jnp.allclose(loss2, ref2, rtol=1e-4, atol=1e-2), (loss2, ref2)

    # Case 3: padded rows and columns (sentinel labels), integer labels,
    # multiple row tiles and column chunks.
    N3 = 200
    y_pred3 = jax.random.normal(k1, (N3, 1), dtype=jnp.float32)
    y_true3 = jax.random.randint(k2, (N3, 1), 0, 3).astype(jnp.int32)
    loss3 = jax.block_until_ready(
        contrastive_loss(y_pred3, y_true3, block_m=64, block_n=128))
    ref3 = jax.block_until_ready(_reference_loss(y_pred3, y_true3))
    assert jnp.allclose(loss3, ref3, rtol=1e-4, atol=1e-2), (loss3, ref3)

    # Case 4: default tile selection on a mid-sized batch (gm >= 2 so the
    # "parallel" row axis actually shards on v7x).
    N4 = 384
    y_pred4 = jax.random.normal(k3, (N4, 1), dtype=jnp.float32)
    y_true4 = jax.random.randint(k4, (N4, 1), 0, 2).astype(jnp.float32)
    loss4 = jax.block_until_ready(contrastive_loss(y_pred4, y_true4))
    ref4 = jax.block_until_ready(_reference_loss(y_pred4, y_true4))
    assert jnp.allclose(loss4, ref4, rtol=1e-4, atol=1e-2), (loss4, ref4)

    print("KERNEL_OK")
</pallas_src>

<mosaic_0001>
module attributes {stable_mosaic.version = 11 : i64} {
  func.func @kernel(%arg0: i32, %arg1: memref<8x1xf32, #tpu.memory_space<vmem>>, %arg2: memref<1x128xf32, #tpu.memory_space<vmem>>, %arg3: memref<8x1xf32, #tpu.memory_space<vmem>>, %arg4: memref<1x128xf32, #tpu.memory_space<vmem>>, %arg5: memref<1x8x128xf32, #tpu.memory_space<vmem>>) attributes {dimension_semantics = [#tpu.dimension_semantics<parallel>], iteration_bounds = array<i64: 1>, scalar_prefetch = 0 : i64, scratch_operands = 0 : i64, tpu.core_type = #tpu.core_type<tc>, window_params = [{transform_indices = @transform_0, window_bounds = array<i64: 8, 1>}, {pipeline_mode = #tpu.pipeline_mode<synchronous>, transform_indices = @transform_1, window_bounds = array<i64: 1, 128>}, {transform_indices = @transform_2, window_bounds = array<i64: 8, 1>}, {pipeline_mode = #tpu.pipeline_mode<synchronous>, transform_indices = @transform_3, window_bounds = array<i64: 1, 128>}, {transform_indices = @transform_4, window_bounds = array<i64: 1, 8, 128>}]} {
    %c0 = arith.constant 0 : index
    %c0_0 = arith.constant 0 : index
    %0 = vector.load %arg1[%c0, %c0_0] : memref<8x1xf32, #tpu.memory_space<vmem>>, vector<8x1xf32>
    %c0_1 = arith.constant 0 : index
    %c0_2 = arith.constant 0 : index
    %1 = vector.load %arg3[%c0_1, %c0_2] : memref<8x1xf32, #tpu.memory_space<vmem>>, vector<8x1xf32>
    %c0_3 = arith.constant 0 : index
    %c0_4 = arith.constant 0 : index
    %2 = vector.load %arg2[%c0_3, %c0_4] : memref<1x128xf32, #tpu.memory_space<vmem>>, vector<1x128xf32>
    %c0_5 = arith.constant 0 : index
    %c0_6 = arith.constant 0 : index
    %3 = vector.load %arg4[%c0_5, %c0_6] : memref<1x128xf32, #tpu.memory_space<vmem>>, vector<1x128xf32>
    %4 = vector.broadcast %0 : vector<8x1xf32> to vector<8x128xf32>
    %5 = vector.broadcast %2 : vector<1x128xf32> to vector<8x128xf32>
    %6 = arith.subf %4, %5 : vector<8x128xf32>
    %7 = arith.mulf %6, %6 : vector<8x128xf32>
    %8 = vector.broadcast %1 : vector<8x1xf32> to vector<8x128xf32>
    %9 = vector.broadcast %3 : vector<1x128xf32> to vector<8x128xf32>
    %10 = arith.cmpf oeq, %8, %9 : vector<8x128xf32>
    %cst = arith.constant 0.000000e+00 : f32
    %11 = vector.broadcast %cst : f32 to vector<8x128xf32>
    %12 = arith.select %10, %7, %11 : vector<8x128xi1>, vector<8x128xf32>
    %cst_7 = arith.constant dense<0.000000e+00> : vector<128xf32>
    %13 = vector.multi_reduction <add>, %12, %cst_7 [0] : vector<8x128xf32> to vector<128xf32>
    %14 = vector.shape_cast %13 : vector<128xf32> to vector<1x128xf32>
    %15 = vector.shape_cast %14 : vector<1x128xf32> to vector<1x1x128xf32>
    %cst_8 = arith.constant dense<0.000000e+00> : vector<1xf32>
    %16 = vector.multi_reduction <add>, %15, %cst_8 [1, 2] : vector<1x1x128xf32> to vector<1xf32>
    %17 = vector.shape_cast %16 : vector<1xf32> to vector<1x1x1xf32>
    %18 = vector.extract %17[0, 0, 0] : f32 from vector<1x1x1xf32>
    %19 = vector.broadcast %18 : f32 to vector<1x8x128xf32>
    %c0_9 = arith.constant 0 : index
    %c0_10 = arith.constant 0 : index
    %c0_11 = arith.constant 0 : index
    %20 = vector.load %arg5[%c0_9, %c0_10, %c0_11] : memref<1x8x128xf32, #tpu.memory_space<vmem>>, vector<1x8x128xf32>
    tpu.vector_store %arg5[%c0_9, %c0_10, %c0_11], %19 {strides = array<i32>} : memref<1x8x128xf32, #tpu.memory_space<vmem>>, vector<1x8x128xf32>,
    return
  }
  func.func @transform_0(%arg0: i32) -> (i32, i32) {
    %c0_i32 = arith.constant 0 : i32
    %c0_i32_0 = arith.constant 0 : i32
    return %arg0, %c0_i32 : i32, i32
  }
  func.func @transform_1(%arg0: i32) -> (i32, i32) {
    %c0_i32 = arith.constant 0 : i32
    %c0_i32_0 = arith.constant 0 : i32
    %c0_i32_1 = arith.constant 0 : i32
    return %c0_i32, %c0_i32_0 : i32, i32
  }
  func.func @transform_2(%arg0: i32) -> (i32, i32) {
    %c0_i32 = arith.constant 0 : i32
    %c0_i32_0 = arith.constant 0 : i32
    return %arg0, %c0_i32 : i32, i32
  }
  func.func @transform_3(%arg0: i32) -> (i32, i32) {
    %c0_i32 = arith.constant 0 : i32
    %c0_i32_0 = arith.constant 0 : i32
    %c0_i32_1 = arith.constant 0 : i32
    return %c0_i32, %c0_i32_0 : i32, i32
  }
  func.func @transform_4(%arg0: i32) -> (i32, i32, i32) {
    %c0_i32 = arith.constant 0 : i32
    %c0_i32_0 = arith.constant 0 : i32
    %c0_i32_1 = arith.constant 0 : i32
    return %arg0, %c0_i32, %c0_i32_0 : i32, i32, i32
  }
}

</mosaic_0001>

<llo_original>
// kernel: _contrastive_loss_impl.1
$region0: #{_contrastive_loss_impl.1}
  #allocation0 [shape = 'u32[]', space=smem, size = 0x4, offset = 0x4, fixed_abs, tag = 'smem constant byte address 0x4 - core index']
  #allocation1 [shape = 'u32[72,128]{1,0:T(1,128)}', space=vmem, size = 0x9000, scoped, tag = 'internal scratch']
  %s0 = inlined_call_operand.vmem [shape: f32[8,1], index: 0, kind: input, shape index: {}]
  %s1 = inlined_call_operand.vmem [shape: f32[1,128], index: 1, kind: input, shape index: {}]
  %s2 = inlined_call_operand.vmem [shape: f32[8,1], index: 2, kind: input, shape index: {}]
  %s3 = inlined_call_operand.vmem [shape: f32[1,128], index: 3, kind: input, shape index: {}]
  %s4 = inlined_call_operand.vmem [shape: f32[1,8,128], index: 4, kind: output, shape index: {}]
  %s5 = sld [smem:[#allocation0]]
  $region26: #{_contrastive_loss_impl.1} parent=0
    _
  %s7 = ssub.s32 1, %s5
  %s8 = scalar_select 0, %s7, %s5
  // Predicated region
  $region2: #{_contrastive_loss_impl.1} parent=0 // pred_check
    _
  $region3: #{_contrastive_loss_impl.1} parent=0 // pred_check_branch
    %10 = sbr.rel (0) target = $region5
  $region4: #{_contrastive_loss_impl.1} parent=0 // pred_region
    _
  $region5: #{_contrastive_loss_impl.1} parent=0 // pred_fallthru
    _
  // Predicated region
  $region6: #{_contrastive_loss_impl.1} parent=0 // pred_check
    _
  $region7: #{_contrastive_loss_impl.1} parent=0 // pred_check_branch
    %12 = sbr.rel (0) target = $region9
  $region8: #{_contrastive_loss_impl.1} parent=0 // pred_region
    _
  $region9: #{_contrastive_loss_impl.1} parent=0 // pred_fallthru
    _
  // Predicated region
  $region10: #{_contrastive_loss_impl.1} parent=0 // pred_check
    _
  $region11: #{_contrastive_loss_impl.1} parent=0 // pred_check_branch
    %14 = sbr.rel (0) target = $region13
  $region12: #{_contrastive_loss_impl.1} parent=0 // pred_region
    _
  $region13: #{_contrastive_loss_impl.1} parent=0 // pred_fallthru
    _
  // Predicated region
  $region14: #{_contrastive_loss_impl.1} parent=0 // pred_check
    _
  $region15: #{_contrastive_loss_impl.1} parent=0 // pred_check_branch
    %16 = sbr.rel (0) target = $region17
  $region16: #{_contrastive_loss_impl.1} parent=0 // pred_region
    _
  $region17: #{_contrastive_loss_impl.1} parent=0 // pred_fallthru
    _
  %v17 = vld [vmem:[%s0] sm:$0xff]
  %v18 = vld [vmem:[%s2] sm:$0xff]
  %v19 = vld [vmem:[%s1] sm:$0x1]
  %v20 = vld [vmem:[%s3] sm:$0x1]
  %22 = vset.pattern.permute.xlu0 0
  %23 = vperm.xlu0 %22, %v17
  %v24 = vpop.permute.xlu0 %23
  %v27 = vperm.slane %v19, 0
  %v29 = vsub.f32 %v24, %v27
  %v30 = vmul.f32 %v29, %v29
  %32 = vset.pattern.permute.xlu0 0
  %33 = vperm.xlu0 %32, %v18
  %v34 = vpop.permute.xlu0 %33
  %v37 = vperm.slane %v20, 0
  %vm39 = vcmp.eq.f32.partialorder %v34, %v37
  %v40 = vsel %vm39, %v30, 0.0
  %v41 = vrot.slane %v40, 4
  %v42 = vadd.f32 %v40, %v41
  %v43 = vrot.slane %v42, 2
  %v44 = vadd.f32 %v42, %v43
  %v45 = vrot.slane %v44, 1
  %v46 = vadd.f32 %v44, %v45
  %vm47 = vcmask 1040384
  %v48 = vsel %vm47, %v46, 0.0
  %49 = vadd.xlane.f32.xlu0 %v48
  %v50 = vpop.xlane.xlu0 %49
  %v51 = vrot.slane %v50, 4
  %v52 = vadd.f32 %v50, %v51
  %v53 = vrot.slane %v52, 2
  %v54 = vadd.f32 %v52, %v53
  %v55 = vrot.slane %v54, 1
  %v56 = vadd.f32 %v54, %v55
  %s57 = vtos %v56
  %v58 = vstv %s57
  %59 = vst [vmem:[%s4] sm:$0xff] %v58
  // Predicated region
  $region18: #{_contrastive_loss_impl.1} parent=0 // pred_check
    _
  $region19: #{_contrastive_loss_impl.1} parent=0 // pred_check_branch
    %61 = sbr.rel (0) target = $region21
  $region20: #{_contrastive_loss_impl.1} parent=0 // pred_region
    _
  $region21: #{_contrastive_loss_impl.1} parent=0 // pred_fallthru
    _
  // Predicated region
  $region22: #{_contrastive_loss_impl.1} parent=0 // pred_check
    _
  $region23: #{_contrastive_loss_impl.1} parent=0 // pred_check_branch
    %63 = sbr.rel (0) target = $region25
  $region24: #{_contrastive_loss_impl.1} parent=0 // pred_region
    _
  $region25: #{_contrastive_loss_impl.1} parent=0 // pred_fallthru
    _

</llo_original>
